<compile_context>
chip_gen: v5e
topology: v5e:2x2
jax: 0.10.0
libtpu: 0.0.40
codegen_flags: <defaults>
</compile_context>

<pallas_src>
import functools

import jax
import jax.numpy as jnp
from jax.experimental import pallas as pl
from jax.experimental.pallas import tpu as pltpu


def _round_up(x: int, m: int) -> int:
    return ((x + m - 1) // m) * m


def _ce_block_sum(logits, tgt):
    """Sum over a (TM, C) tile of  logsumexp(x_n) - x_n[target_n]  (padded rows masked).

    logits: (TM, C) float32; tgt: (TM, 1) int32, -1 marks a padded (invalid) row.
    """
    tm, c = logits.shape
    class_ids = jax.lax.broadcasted_iota(jnp.int32, (tm, c), 1)
    m = jnp.max(logits, axis=-1, keepdims=True)
    lse = m + jnp.log(jnp.sum(jnp.exp(logits - m), axis=-1, keepdims=True))
    tgt_logit = jnp.sum(jnp.where(class_ids == tgt, logits, 0.0),
                        axis=-1, keepdims=True)
    valid = (tgt >= 0).astype(jnp.float32)
    return jnp.sum((lse - tgt_logit) * valid)


def _bce_sum(p, y, n_valid):
    """Sum of PyTorch-BCELoss terms over a lane-dense (1, M) tile (padding masked)."""
    p = p.astype(jnp.float32)
    y = y.astype(jnp.float32)
    logp = jnp.maximum(jnp.log(p), -100.0)        # PyTorch BCELoss clamps at -100
    log1mp = jnp.maximum(jnp.log(1.0 - p), -100.0)
    lane = jax.lax.broadcasted_iota(jnp.int32, p.shape, 1)
    terms = jnp.where(lane < n_valid, -(y * logp + (1.0 - y) * log1mp), 0.0)
    return jnp.sum(terms)


# ----------------------------------------------------------------------------- kernels

def _make_train_kernel(n_ce_rows: int, n_bce_elems: int):
    """Fused kernel: grid=(num_batch_blocks,); per step reduces one tile of each CE
    problem; the BCE term and final normalization happen at the last step."""

    def kernel(l1_ref, t1_ref, l2_ref, t2_ref, p_ref, y_ref, out_ref, acc_ref):
        j = pl.program_id(0)

        @pl.when(j == 0)
        def _():
            acc_ref[0] = jnp.float32(0.0)

        acc_ref[0] += (_ce_block_sum(l1_ref[...].astype(jnp.float32), t1_ref[...])
                       + _ce_block_sum(l2_ref[...].astype(jnp.float32), t2_ref[...]))

        @pl.when(j == pl.num_programs(0) - 1)
        def _():
            bce = _bce_sum(p_ref[...], y_ref[...], n_bce_elems)
            out_ref[0, 0] = (acc_ref[0] / jnp.float32(n_ce_rows)
                             + bce / jnp.float32(n_bce_elems))

    return kernel


def _make_ce_kernel(n_rows: int):
    """CE-only kernel (eval path), tiled over the batch with an SMEM accumulator."""

    def kernel(l_ref, t_ref, out_ref, acc_ref):
        j = pl.program_id(0)

        @pl.when(j == 0)
        def _():
            acc_ref[0] = jnp.float32(0.0)

        acc_ref[0] += _ce_block_sum(l_ref[...].astype(jnp.float32), t_ref[...])

        @pl.when(j == pl.num_programs(0) - 1)
        def _():
            out_ref[0, 0] = acc_ref[0] / jnp.float32(n_rows)

    return kernel


# ----------------------------------------------------------------------------- wrappers

def _batch_tiling(n: int, block_m: int):
    # Keep tiles (8,128)-aligned on the sublane dim and sized so 2 logits inputs
    # double-buffered stay well under scoped VMEM even on v7x (64 MiB) for large C.
    tm = min(block_m, _round_up(n, 8))
    n_blocks = pl.cdiv(n, tm)
    return tm, n_blocks, n_blocks * tm


def _pad_ce_inputs(logits, targets, n, n_pad):
    tgt = targets.astype(jnp.int32).reshape(n, 1)
    if n_pad != n:
        logits = jnp.pad(logits, ((0, n_pad - n), (0, 0)))
        tgt = jnp.pad(tgt, ((0, n_pad - n), (0, 0)), constant_values=-1)
    return logits, tgt


def pairwise_loss_train(input1, input2, input3, target_1, target_2, label_d,
                        block_m: int = 128):
    n, c = input1.shape
    assert input2.shape == (n, c)
    tm, n_blocks, n_pad = _batch_tiling(n, block_m)

    l1, t1 = _pad_ce_inputs(input1, target_1, n, n_pad)
    l2, t2 = _pad_ce_inputs(input2, target_2, n, n_pad)

    # BCE operands: flatten to a lane-dense (1, M) row, pad M to a multiple of 128.
    n_bce = input3.size
    m_pad = max(128, _round_up(n_bce, 128))
    p = input3.reshape(1, n_bce)
    y = label_d.astype(input3.dtype).reshape(1, n_bce)
    if m_pad != n_bce:
        p = jnp.pad(p, ((0, 0), (0, m_pad - n_bce)), constant_values=0.5)
        y = jnp.pad(y, ((0, 0), (0, m_pad - n_bce)))

    ce_spec = pl.BlockSpec((tm, c), lambda j: (j, 0))
    tgt_spec = pl.BlockSpec((tm, 1), lambda j: (j, 0))
    bce_spec = pl.BlockSpec((1, m_pad), lambda j: (0, 0))   # resident across the grid

    out = pl.pallas_call(
        _make_train_kernel(n, n_bce),
        out_shape=jax.ShapeDtypeStruct((1, 1), jnp.float32),
        grid=(n_blocks,),
        in_specs=[ce_spec, tgt_spec, ce_spec, tgt_spec, bce_spec, bce_spec],
        out_specs=pl.BlockSpec((1, 1), lambda j: (0, 0),
                               memory_space=pltpu.MemorySpace.SMEM),
        scratch_shapes=[pltpu.SMEM((1,), jnp.float32)],
        compiler_params=pltpu.CompilerParams(
            dimension_semantics=("arbitrary",)),   # reduction into one scalar
    )(l1, t1, l2, t2, p, y)
    return out[0, 0]


def cross_entropy_loss(logits, targets, block_m: int = 128):
    n, c = logits.shape
    tm, n_blocks, n_pad = _batch_tiling(n, block_m)
    l, t = _pad_ce_inputs(logits, targets, n, n_pad)

    out = pl.pallas_call(
        _make_ce_kernel(n),
        out_shape=jax.ShapeDtypeStruct((1, 1), jnp.float32),
        grid=(n_blocks,),
        in_specs=[pl.BlockSpec((tm, c), lambda j: (j, 0)),
                  pl.BlockSpec((tm, 1), lambda j: (j, 0))],
        out_specs=pl.BlockSpec((1, 1), lambda j: (0, 0),
                               memory_space=pltpu.MemorySpace.SMEM),
        scratch_shapes=[pltpu.SMEM((1,), jnp.float32)],
        compiler_params=pltpu.CompilerParams(
            dimension_semantics=("arbitrary",)),
    )(l, t)
    return out[0, 0]


def pairwise_loss(input1=None, input2=None, input3=None,
                  target_1=None, target_2=None, label_d=None, ttt=None):
    """Forward pass of PairwiseLoss (no learnable parameters)."""
    if ttt == 'train':
        # TODO(synk): the reduction axis is serial ('arbitrary'); a per-core partial
        # sum split would be needed to use both v7x TensorCores for very large N.
        return pairwise_loss_train(input1, input2, input3, target_1, target_2, label_d)
    else:
        return cross_entropy_loss(input1, target_1)


# ----------------------------------------------------------------------------- reference

def _reference(input1, input2, input3, t1, t2, yd):
    def ce(x, t):
        x = x.astype(jnp.float32)
        lse = jax.scipy.special.logsumexp(x, axis=-1)
        picked = jnp.take_along_axis(x, t[:, None].astype(jnp.int32), axis=-1)[:, 0]
        return jnp.mean(lse - picked)

    def bce(p, y):
        p = p.astype(jnp.float32)
        y = y.astype(jnp.float32)
        logp = jnp.maximum(jnp.log(p), -100.0)
        log1mp = jnp.maximum(jnp.log(1.0 - p), -100.0)
        return jnp.mean(-(y * logp + (1.0 - y) * log1mp))

    return ce(input1, t1) + ce(input2, t2) + bce(input3, yd)


if __name__ == "__main__":
    key = jax.random.PRNGKey(0)
    k1, k2, k3, k4, k5, k6 = jax.random.split(key, 6)

    N, C = 8, 32  # batch of 8, 32 classes
    input1 = jax.random.normal(k1, (N, C), dtype=jnp.float32)
    input2 = jax.random.normal(k2, (N, C), dtype=jnp.float32)
    target_1 = jax.random.randint(k3, (N,), 0, C, dtype=jnp.int32)
    target_2 = jax.random.randint(k4, (N,), 0, C, dtype=jnp.int32)
    # input3 must be probabilities (BCELoss expects sigmoid outputs).
    input3 = jax.nn.sigmoid(jax.random.normal(k5, (N, 1), dtype=jnp.float32))
    label_d = jax.random.bernoulli(k6, 0.5, (N, 1)).astype(jnp.float32)

    train_loss = pairwise_loss(input1, input2, input3, target_1, target_2,
                               label_d, ttt='train')
    eval_loss = pairwise_loss(input1=input1, target_1=target_1, ttt='eval')
    jax.block_until_ready((train_loss, eval_loss))

    ref = _reference(input1, input2, input3, target_1, target_2, label_d)
    assert abs(float(train_loss) - float(ref)) < 1e-3, (float(train_loss), float(ref))

    print("KERNEL_OK")
</pallas_src>

<mosaic_0001>
module attributes {stable_mosaic.version = 11 : i64} {
  func.func @kernel(%arg0: i32, %arg1: memref<8x32xf32, #tpu.memory_space<vmem>>, %arg2: memref<8x1xi32, #tpu.memory_space<vmem>>, %arg3: memref<8x32xf32, #tpu.memory_space<vmem>>, %arg4: memref<8x1xi32, #tpu.memory_space<vmem>>, %arg5: memref<1x128xf32, #tpu.memory_space<vmem>>, %arg6: memref<1x128xf32, #tpu.memory_space<vmem>>, %arg7: memref<1x1xf32, #tpu.memory_space<smem>>, %arg8: memref<1xf32, #tpu.memory_space<smem>>) attributes {dimension_semantics = [#tpu.dimension_semantics<arbitrary>], iteration_bounds = array<i64: 1>, scalar_prefetch = 0 : i64, scratch_operands = 1 : i64, tpu.core_type = #tpu.core_type<tc>, window_params = [{transform_indices = @transform_0, window_bounds = array<i64: 8, 32>}, {transform_indices = @transform_1, window_bounds = array<i64: 8, 1>}, {transform_indices = @transform_2, window_bounds = array<i64: 8, 32>}, {transform_indices = @transform_3, window_bounds = array<i64: 8, 1>}, {pipeline_mode = #tpu.pipeline_mode<synchronous>, transform_indices = @transform_4, window_bounds = array<i64: 1, 128>}, {pipeline_mode = #tpu.pipeline_mode<synchronous>, transform_indices = @transform_5, window_bounds = array<i64: 1, 128>}, {transform_indices = @transform_6, window_bounds = array<i64: 1, 1>}]} {
    %c0_i32 = arith.constant 0 : i32
    %0 = arith.cmpi eq, %arg0, %c0_i32 : i32
    %1 = arith.extui %0 : i1 to i32
    %c0_i32_0 = arith.constant 0 : i32
    %2 = arith.cmpi ne, %1, %c0_i32_0 : i32
    scf.if %2 {
      %cst_23 = arith.constant 0.000000e+00 : f32
      %c0_24 = arith.constant 0 : index
      %66 = memref.load %arg8[%c0_24] : memref<1xf32, #tpu.memory_space<smem>>
      memref.store %cst_23, %arg8[%c0_24] : memref<1xf32, #tpu.memory_space<smem>>
    } else {
    }
    %c0 = arith.constant 0 : index
    %3 = memref.load %arg8[%c0] : memref<1xf32, #tpu.memory_space<smem>>
    %c0_1 = arith.constant 0 : index
    %c0_2 = arith.constant 0 : index
    %4 = vector.load %arg1[%c0_1, %c0_2] : memref<8x32xf32, #tpu.memory_space<vmem>>, vector<8x32xf32>
    %c0_3 = arith.constant 0 : index
    %c0_4 = arith.constant 0 : index
    %5 = vector.load %arg2[%c0_3, %c0_4] : memref<8x1xi32, #tpu.memory_space<vmem>>, vector<8x1xi32>
    %6 = tpu.iota {dimensions = array<i32: 1>} : vector<8x32xi32>
    %cst = arith.constant dense<0xFF800000> : vector<8xf32>
    %7 = vector.multi_reduction <maximumf>, %4, %cst [1] : vector<8x32xf32> to vector<8xf32>
    %8 = vector.shape_cast %7 : vector<8xf32> to vector<8x1xf32>
    %9 = vector.broadcast %8 : vector<8x1xf32> to vector<8x32xf32>
    %10 = arith.subf %4, %9 : vector<8x32xf32>
    %11 = math.exp %10 : vector<8x32xf32>
    %cst_5 = arith.constant dense<0.000000e+00> : vector<8xf32>
    %12 = vector.multi_reduction <add>, %11, %cst_5 [1] : vector<8x32xf32> to vector<8xf32>
    %13 = vector.shape_cast %12 : vector<8xf32> to vector<8x1xf32>
    %14 = math.log %13 : vector<8x1xf32>
    %15 = arith.addf %8, %14 : vector<8x1xf32>
    %16 = vector.broadcast %5 : vector<8x1xi32> to vector<8x32xi32>
    %17 = arith.cmpi eq, %6, %16 : vector<8x32xi32>
    %cst_6 = arith.constant 0.000000e+00 : f32
    %18 = vector.broadcast %cst_6 : f32 to vector<8x32xf32>
    %19 = arith.select %17, %4, %18 : vector<8x32xi1>, vector<8x32xf32>
    %cst_7 = arith.constant dense<0.000000e+00> : vector<8xf32>
    %20 = vector.multi_reduction <add>, %19, %cst_7 [1] : vector<8x32xf32> to vector<8xf32>
    %21 = vector.shape_cast %20 : vector<8xf32> to vector<8x1xf32>
    %c0_i32_8 = arith.constant 0 : i32
    %22 = vector.broadcast %c0_i32_8 : i32 to vector<8x1xi32>
    %23 = arith.cmpi sge, %5, %22 : vector<8x1xi32>
    %24 = arith.extui %23 : vector<8x1xi1> to vector<8x1xi32>
    %25 = arith.sitofp %24 : vector<8x1xi32> to vector<8x1xf32>
    %26 = arith.subf %15, %21 : vector<8x1xf32>
    %27 = arith.mulf %26, %25 : vector<8x1xf32>
    %28 = vector.shape_cast %27 : vector<8x1xf32> to vector<1x8x1xf32>
    %cst_9 = arith.constant dense<0.000000e+00> : vector<1xf32>
    %29 = vector.multi_reduction <add>, %28, %cst_9 [1, 2] : vector<1x8x1xf32> to vector<1xf32>
    %30 = vector.shape_cast %29 : vector<1xf32> to vector<1x1x1xf32>
    %31 = vector.extract %30[0, 0, 0] : f32 from vector<1x1x1xf32>
    %c0_10 = arith.constant 0 : index
    %c0_11 = arith.constant 0 : index
    %32 = vector.load %arg3[%c0_10, %c0_11] : memref<8x32xf32, #tpu.memory_space<vmem>>, vector<8x32xf32>
    %c0_12 = arith.constant 0 : index
    %c0_13 = arith.constant 0 : index
    %33 = vector.load %arg4[%c0_12, %c0_13] : memref<8x1xi32, #tpu.memory_space<vmem>>, vector<8x1xi32>
    %34 = tpu.iota {dimensions = array<i32: 1>} : vector<8x32xi32>
    %cst_14 = arith.constant dense<0xFF800000> : vector<8xf32>
    %35 = vector.multi_reduction <maximumf>, %32, %cst_14 [1] : vector<8x32xf32> to vector<8xf32>
    %36 = vector.shape_cast %35 : vector<8xf32> to vector<8x1xf32>
    %37 = vector.broadcast %36 : vector<8x1xf32> to vector<8x32xf32>
    %38 = arith.subf %32, %37 : vector<8x32xf32>
    %39 = math.exp %38 : vector<8x32xf32>
    %cst_15 = arith.constant dense<0.000000e+00> : vector<8xf32>
    %40 = vector.multi_reduction <add>, %39, %cst_15 [1] : vector<8x32xf32> to vector<8xf32>
    %41 = vector.shape_cast %40 : vector<8xf32> to vector<8x1xf32>
    %42 = math.log %41 : vector<8x1xf32>
    %43 = arith.addf %36, %42 : vector<8x1xf32>
    %44 = vector.broadcast %33 : vector<8x1xi32> to vector<8x32xi32>
    %45 = arith.cmpi eq, %34, %44 : vector<8x32xi32>
    %cst_16 = arith.constant 0.000000e+00 : f32
    %46 = vector.broadcast %cst_16 : f32 to vector<8x32xf32>
    %47 = arith.select %45, %32, %46 : vector<8x32xi1>, vector<8x32xf32>
    %cst_17 = arith.constant dense<0.000000e+00> : vector<8xf32>
    %48 = vector.multi_reduction <add>, %47, %cst_17 [1] : vector<8x32xf32> to vector<8xf32>
    %49 = vector.shape_cast %48 : vector<8xf32> to vector<8x1xf32>
    %c0_i32_18 = arith.constant 0 : i32
    %50 = vector.broadcast %c0_i32_18 : i32 to vector<8x1xi32>
    %51 = arith.cmpi sge, %33, %50 : vector<8x1xi32>
    %52 = arith.extui %51 : vector<8x1xi1> to vector<8x1xi32>
    %53 = arith.sitofp %52 : vector<8x1xi32> to vector<8x1xf32>
    %54 = arith.subf %43, %49 : vector<8x1xf32>
    %55 = arith.mulf %54, %53 : vector<8x1xf32>
    %56 = vector.shape_cast %55 : vector<8x1xf32> to vector<1x8x1xf32>
    %cst_19 = arith.constant dense<0.000000e+00> : vector<1xf32>
    %57 = vector.multi_reduction <add>, %56, %cst_19 [1, 2] : vector<1x8x1xf32> to vector<1xf32>
    %58 = vector.shape_cast %57 : vector<1xf32> to vector<1x1x1xf32>
    %59 = vector.extract %58[0, 0, 0] : f32 from vector<1x1x1xf32>
    %60 = arith.addf %31, %59 : f32
    %61 = arith.addf %3, %60 : f32
    %c0_20 = arith.constant 0 : index
    %62 = memref.load %arg8[%c0_20] : memref<1xf32, #tpu.memory_space<smem>>
    memref.store %61, %arg8[%c0_20] : memref<1xf32, #tpu.memory_space<smem>>
    %c0_i32_21 = arith.constant 0 : i32
    %63 = arith.cmpi eq, %arg0, %c0_i32_21 : i32
    %64 = arith.extui %63 : i1 to i32
    %c0_i32_22 = arith.constant 0 : i32
    %65 = arith.cmpi ne, %64, %c0_i32_22 : i32
    scf.if %65 {
      %c0_23 = arith.constant 0 : index
      %c0_24 = arith.constant 0 : index
      %66 = vector.load %arg5[%c0_23, %c0_24] : memref<1x128xf32, #tpu.memory_space<vmem>>, vector<1x128xf32>
      %c0_25 = arith.constant 0 : index
      %c0_26 = arith.constant 0 : index
      %67 = vector.load %arg6[%c0_25, %c0_26] : memref<1x128xf32, #tpu.memory_space<vmem>>, vector<1x128xf32>
      %68 = math.log %66 : vector<1x128xf32>
      %cst_27 = arith.constant -1.000000e+02 : f32
      %69 = vector.broadcast %cst_27 : f32 to vector<1x128xf32>
      %70 = arith.maximumf %68, %69 : vector<1x128xf32>
      %cst_28 = arith.constant 1.000000e+00 : f32
      %71 = vector.broadcast %cst_28 : f32 to vector<1x128xf32>
      %72 = arith.subf %71, %66 : vector<1x128xf32>
      %73 = math.log %72 : vector<1x128xf32>
      %cst_29 = arith.constant -1.000000e+02 : f32
      %74 = vector.broadcast %cst_29 : f32 to vector<1x128xf32>
      %75 = arith.maximumf %73, %74 : vector<1x128xf32>
      %76 = tpu.iota {dimensions = array<i32: 1>} : vector<1x128xi32>
      %c8_i32 = arith.constant 8 : i32
      %77 = vector.broadcast %c8_i32 : i32 to vector<1x128xi32>
      %78 = arith.cmpi slt, %76, %77 : vector<1x128xi32>
      %79 = arith.mulf %67, %70 : vector<1x128xf32>
      %cst_30 = arith.constant 1.000000e+00 : f32
      %80 = vector.broadcast %cst_30 : f32 to vector<1x128xf32>
      %81 = arith.subf %80, %67 : vector<1x128xf32>
      %82 = arith.mulf %81, %75 : vector<1x128xf32>
      %83 = arith.addf %79, %82 : vector<1x128xf32>
      %cst_31 = arith.constant 0.000000e+00 : f32
      %84 = vector.broadcast %cst_31 : f32 to vector<1x128xf32>
      %85 = arith.subf %84, %83 : vector<1x128xf32>
      %cst_32 = arith.constant 0.000000e+00 : f32
      %86 = vector.broadcast %cst_32 : f32 to vector<1x128xf32>
      %87 = arith.select %78, %85, %86 : vector<1x128xi1>, vector<1x128xf32>
      %88 = vector.shape_cast %87 : vector<1x128xf32> to vector<1x1x128xf32>
      %cst_33 = arith.constant dense<0.000000e+00> : vector<1xf32>
      %89 = vector.multi_reduction <add>, %88, %cst_33 [1, 2] : vector<1x1x128xf32> to vector<1xf32>
      %90 = vector.shape_cast %89 : vector<1xf32> to vector<1x1x1xf32>
      %91 = vector.extract %90[0, 0, 0] : f32 from vector<1x1x1xf32>
      %c0_34 = arith.constant 0 : index
      %92 = memref.load %arg8[%c0_34] : memref<1xf32, #tpu.memory_space<smem>>
      %cst_35 = arith.constant 8.000000e+00 : f32
      %93 = arith.divf %92, %cst_35 : f32
      %cst_36 = arith.constant 8.000000e+00 : f32
      %94 = arith.divf %91, %cst_36 : f32
      %95 = arith.addf %93, %94 : f32
      %c0_37 = arith.constant 0 : index
      %c0_38 = arith.constant 0 : index
      %96 = memref.load %arg7[%c0_37, %c0_38] : memref<1x1xf32, #tpu.memory_space<smem>>
      memref.store %95, %arg7[%c0_37, %c0_38] : memref<1x1xf32, #tpu.memory_space<smem>>
    } else {
    }
    return
  }
  func.func @transform_0(%arg0: i32) -> (i32, i32) {
    %c0_i32 = arith.constant 0 : i32
    %c0_i32_0 = arith.constant 0 : i32
    return %arg0, %c0_i32 : i32, i32
  }
  func.func @transform_1(%arg0: i32) -> (i32, i32) {
    %c0_i32 = arith.constant 0 : i32
    %c0_i32_0 = arith.constant 0 : i32
    return %arg0, %c0_i32 : i32, i32
  }
  func.func @transform_2(%arg0: i32) -> (i32, i32) {
    %c0_i32 = arith.constant 0 : i32
    %c0_i32_0 = arith.constant 0 : i32
    return %arg0, %c0_i32 : i32, i32
  }
  func.func @transform_3(%arg0: i32) -> (i32, i32) {
    %c0_i32 = arith.constant 0 : i32
    %c0_i32_0 = arith.constant 0 : i32
    return %arg0, %c0_i32 : i32, i32
  }
  func.func @transform_4(%arg0: i32) -> (i32, i32) {
    %c0_i32 = arith.constant 0 : i32
    %c0_i32_0 = arith.constant 0 : i32
    %c0_i32_1 = arith.constant 0 : i32
    return %c0_i32, %c0_i32_0 : i32, i32
  }
  func.func @transform_5(%arg0: i32) -> (i32, i32) {
    %c0_i32 = arith.constant 0 : i32
    %c0_i32_0 = arith.constant 0 : i32
    %c0_i32_1 = arith.constant 0 : i32
    return %c0_i32, %c0_i32_0 : i32, i32
  }
  func.func @transform_6(%arg0: i32) -> (i32, i32) {
    %c0_i32 = arith.constant 0 : i32
    %c0_i32_0 = arith.constant 0 : i32
    %c0_i32_1 = arith.constant 0 : i32
    return %c0_i32, %c0_i32_0 : i32, i32
  }
}

</mosaic_0001>

<llo_original>
// kernel: tpu_custom_call.1
$region0: #{tpu_custom_call.1}
  #allocation0 [shape = 'u32[]', space=smem, size = 0x4, offset = 0x4, fixed_abs, tag = 'smem constant byte address 0x4 - core index']
  #allocation1 [shape = 'u32[72,128]{1,0:T(1,128)}', space=vmem, size = 0x9000, scoped, tag = 'internal scratch']
  #allocation2 [shape = 'f32[1]{0:T(128)}', space=smem, size = 0x200, scoped, tag = 'scratch operand']
  %s0 = inlined_call_operand.vmem [shape: f32[8,32], index: 0, kind: input, shape index: {}]
  %s1 = inlined_call_operand.vmem [shape: s32[8,1], index: 1, kind: input, shape index: {}]
  %s2 = inlined_call_operand.vmem [shape: f32[8,32], index: 2, kind: input, shape index: {}]
  %s3 = inlined_call_operand.vmem [shape: s32[8,1], index: 3, kind: input, shape index: {}]
  %s4 = inlined_call_operand.vmem [shape: f32[1,128], index: 4, kind: input, shape index: {}]
  %s5 = inlined_call_operand.vmem [shape: f32[1,128], index: 5, kind: input, shape index: {}]
  %s6 = inlined_call_operand.hbm [shape: f32[1,1], index: 6, kind: output, shape index: {}]
  %s7 = sld [smem:[#allocation0]]
  $region42: #{tpu_custom_call.1} parent=0
    _
  %s9 = ssub.s32 1, %s7
  %s10 = scalar_select 0, %s9, %s7
  $region1: #{tpu_custom_call.1} parent=0
    #allocation3 [shape = 'u8[512]{0}', space=smem, size = 0x200, scoped, tag = 'output window, operand 0, single buffered']
    #allocation4 [shape = 's32[1]{0}', space=sflag, size = 0x4, scoped, tag = 'scoped memory for tpu_custom_call.1']
    %11 = vsyncpa [#allocation4], 0
    // Predicated region
    $region2: #{tpu_custom_call.1} parent=1 // pred_check
      _
    $region3: #{tpu_custom_call.1} parent=1 // pred_check_branch
      %13 = sbr.rel (0) target = $region5
    $region4: #{tpu_custom_call.1} parent=1 // pred_region
      _
    $region5: #{tpu_custom_call.1} parent=1 // pred_fallthru
      _
    // Predicated region
    $region6: #{tpu_custom_call.1} parent=1 // pred_check
      _
    $region7: #{tpu_custom_call.1} parent=1 // pred_check_branch
      %15 = sbr.rel (0) target = $region9
    $region8: #{tpu_custom_call.1} parent=1 // pred_region
      _
    $region9: #{tpu_custom_call.1} parent=1 // pred_fallthru
      _
    // Predicated region
    $region10: #{tpu_custom_call.1} parent=1 // pred_check
      _
    $region11: #{tpu_custom_call.1} parent=1 // pred_check_branch
      %17 = sbr.rel (0) target = $region13
    $region12: #{tpu_custom_call.1} parent=1 // pred_region
      _
    $region13: #{tpu_custom_call.1} parent=1 // pred_fallthru
      _
    // Predicated region
    $region14: #{tpu_custom_call.1} parent=1 // pred_check
      _
    $region15: #{tpu_custom_call.1} parent=1 // pred_check_branch
      %19 = sbr.rel (0) target = $region17
    $region16: #{tpu_custom_call.1} parent=1 // pred_region
      _
    $region17: #{tpu_custom_call.1} parent=1 // pred_fallthru
      _
    // Predicated region
    $region18: #{tpu_custom_call.1} parent=1 // pred_check
      _
    $region19: #{tpu_custom_call.1} parent=1 // pred_check_branch
      %21 = sbr.rel (0) target = $region21
    $region20: #{tpu_custom_call.1} parent=1 // pred_region
      _
    $region21: #{tpu_custom_call.1} parent=1 // pred_fallthru
      _
    // Predicated region
    $region22: #{tpu_custom_call.1} parent=1 // pred_check
      _
    $region23: #{tpu_custom_call.1} parent=1 // pred_check_branch
      %23 = sbr.rel (0) target = $region25
    $region24: #{tpu_custom_call.1} parent=1 // pred_region
      _
    $region25: #{tpu_custom_call.1} parent=1 // pred_fallthru
      _
    %p24 = scmp.eq.s32.totalorder 0, 0
    // Predicated region
    $region26: #{tpu_custom_call.1} parent=1 // pred_check
      %p25 = pneg %p24
    $region27: #{tpu_custom_call.1} parent=1 // pred_check_branch
      %27 = sbr.rel (%p25) target = $region29
    $region28: #{tpu_custom_call.1} parent=1 // pred_region
      %s28 = scalar_lea.smem [#allocation2], 0
      %29 = sst [smem:[%s28]] 0.0
    $region29: #{tpu_custom_call.1} parent=1 // pred_fallthru
      _
    %s30 = sld [smem:[#allocation2]]
    %v31 = vld [vmem:[%s0] sm:$0xff]
    %v32 = vld [vmem:[%s1] sm:$0xff]
    %v33 = vlaneseq
    %v34 = vand.u32 %v33, 127
    %vm35 = vcmask 261120
    %v36 = vsel %vm35, %v31, -inf
    %37 = vmax.xlane.f32.xlu0 %v36
    %v38 = vpop.xlane.xlu0 %37
    %v39 = vsub.f32 %v31, %v38
    %v40 = vmul.f32 %v39, 1.442695
    %v41 = vpow.pop %v40
    %v42 = vsel %vm35, %v41, 0.0
    %43 = vadd.xlane.f32.xlu0 %v42
    %v44 = vpop.xlane.xlu0 %43
    %v45 = vlog2.pop %v44
    %v46 = vmul.f32 %v45, 0.6931472
    %v47 = vadd.f32 %v38, %v46
    %48 = vset.pattern.permute.xlu0 0
    %49 = vperm.xlu0 %48, %v32
    %v50 = vpop.permute.xlu0 %49
    %vm51 = vcmp.eq.s32.totalorder %v34, %v50
    %v52 = vsel %vm51, %v31, 0.0
    %v53 = vsel %vm35, %v52, 0.0
    %54 = vadd.xlane.f32.xlu0 %v53
    %v55 = vpop.xlane.xlu0 %54
    %vm56 = vcmp.ge.s32.totalorder %v32, 0
    %v57 = vsel %vm56, 1, 0
    %v58 = vcvt.s32.f32 %v57
    %v59 = vsub.f32 %v47, %v55
    %v60 = vmul.f32 %v59, %v58
    %vm61 = vcmask 7168
    %v62 = vsel %vm61, %v60, 0.0
    %63 = vadd.xlane.f32.xlu0 %v62
    %v64 = vpop.xlane.xlu0 %63
    %v65 = vrot.slane %v64, 4
    %v66 = vadd.f32 %v64, %v65
    %v67 = vrot.slane %v66, 2
    %v68 = vadd.f32 %v66, %v67
    %v69 = vrot.slane %v68, 1
    %v70 = vadd.f32 %v68, %v69
    %s71 = vtos %v70
    %v72 = vld [vmem:[%s2] sm:$0xff]
    %v73 = vld [vmem:[%s3] sm:$0xff]
    %v74 = vsel %vm35, %v72, -inf
    %75 = vmax.xlane.f32.xlu0 %v74
    %v76 = vpop.xlane.xlu0 %75
    %v77 = vsub.f32 %v72, %v76
    %v78 = vmul.f32 %v77, 1.442695
    %v79 = vpow.pop %v78
    %v80 = vsel %vm35, %v79, 0.0
    %81 = vadd.xlane.f32.xlu0 %v80
    %v82 = vpop.xlane.xlu0 %81
    %v83 = vlog2.pop %v82
    %v84 = vmul.f32 %v83, 0.6931472
    %v85 = vadd.f32 %v76, %v84
    %86 = vset.pattern.permute.xlu0 0
    %87 = vperm.xlu0 %86, %v73
    %v88 = vpop.permute.xlu0 %87
    %vm89 = vcmp.eq.s32.totalorder %v34, %v88
    %v90 = vsel %vm89, %v72, 0.0
    %v91 = vsel %vm35, %v90, 0.0
    %92 = vadd.xlane.f32.xlu0 %v91
    %v93 = vpop.xlane.xlu0 %92
    %vm94 = vcmp.ge.s32.totalorder %v73, 0
    %v95 = vsel %vm94, 1, 0
    %v96 = vcvt.s32.f32 %v95
    %v97 = vsub.f32 %v85, %v93
    %v98 = vmul.f32 %v97, %v96
    %v99 = vsel %vm61, %v98, 0.0
    %100 = vadd.xlane.f32.xlu0 %v99
    %v101 = vpop.xlane.xlu0 %100
    %v102 = vrot.slane %v101, 4
    %v103 = vadd.f32 %v101, %v102
    %v104 = vrot.slane %v103, 2
    %v105 = vadd.f32 %v103, %v104
    %v106 = vrot.slane %v105, 1
    %v107 = vadd.f32 %v105, %v106
    %s108 = vtos %v107
    %s109 = sadd.f32 %s71, %s108
    %s110 = sadd.f32 %s30, %s109
    %s111 = scalar_lea.smem [#allocation2], 0
    %112 = sst [smem:[%s111]] %s110
    // Predicated region
    $region30: #{tpu_custom_call.1} parent=1 // pred_check
      %p113 = pneg %p24
    $region31: #{tpu_custom_call.1} parent=1 // pred_check_branch
      %115 = sbr.rel (%p113) target = $region33
    $region32: #{tpu_custom_call.1} parent=1 // pred_region
      %v116 = vld [vmem:[%s4] sm:$0x1]
      %v117 = vld [vmem:[%s5] sm:$0x1]
      %v118 = vlog2.pop %v116
      %v119 = vmul.f32 %v118, 0.6931472
      %v120 = vmax.f32 %v119, -100.0
      %v121 = vsub.f32 1.0, %v116
      %v122 = vlog2.pop %v121
      %v123 = vmul.f32 %v122, 0.6931472
      %v124 = vmax.f32 %v123, -100.0
      %vm125 = vcmp.lt.s32.totalorder %v34, 8
      %v126 = vmul.f32 %v117, %v120
      %v127 = vsub.f32 1.0, %v117
      %v128 = vmul.f32 %v127, %v124
      %v129 = vadd.f32 %v126, %v128
      %v130 = vsub.f32 0.0, %v129
      %v131 = vsel %vm125, %v130, 0.0
      %vm132 = vcmask 1040384
      %v133 = vsel %vm132, %v131, 0.0
      %134 = vadd.xlane.f32.xlu0 %v133
      %v135 = vpop.xlane.xlu0 %134
      %v136 = vrot.slane %v135, 4
      %v137 = vadd.f32 %v135, %v136
      %v138 = vrot.slane %v137, 2
      %v139 = vadd.f32 %v137, %v138
      %v140 = vrot.slane %v139, 1
      %v141 = vadd.f32 %v139, %v140
      %s142 = vtos %v141
      %s143 = sld [smem:[#allocation2]]
      %v144 = vrcp.pop 8.0
      %v145 = vmul.f32 8.0, %v144
      %v146 = vsub.f32 1.0, %v145
      %v147 = vmul.f32 %v144, %v146
      %v148 = vadd.f32 %v144, %v147
      %vm149 = vweird.f32 %v144
      %v150 = vsel %vm149, %v144, %v148
      %s151 = vtos %v150
      %s152 = smul.f32 %s143, %s151
      %v153 = vrcp.pop 8.0
      %v154 = vmul.f32 8.0, %v153
      %v155 = vsub.f32 1.0, %v154
      %v156 = vmul.f32 %v153, %v155
      %v157 = vadd.f32 %v153, %v156
      %vm158 = vweird.f32 %v153
      %v159 = vsel %vm158, %v153, %v157
      %s160 = vtos %v159
      %s161 = smul.f32 %s142, %s160
      %s162 = sadd.f32 %s152, %s161
      %s163 = scalar_lea.smem [#allocation3], 0
      %164 = sst [smem:[%s163]] %s162
    $region33: #{tpu_custom_call.1} parent=1 // pred_fallthru
      _
    // Predicated region
    $region34: #{tpu_custom_call.1} parent=1 // pred_check
      _
    $region35: #{tpu_custom_call.1} parent=1 // pred_check_branch
      %166 = sbr.rel (0) target = $region37
    $region36: #{tpu_custom_call.1} parent=1 // pred_region
      %168 = vsyncadd [#allocation4], 0
      %s170 = sshll.u32 %s6, 4
      %s171 = int_to_ptr.hbm [resolvable:$true] %s170
      %173 = dma.smem_to_hbm [#allocation3], 16, %s171, [#allocation4]
    $region37: #{tpu_custom_call.1} parent=1 // pred_fallthru
      _
    // Predicated region
    $region38: #{tpu_custom_call.1} parent=1 // pred_check
      _
    $region39: #{tpu_custom_call.1} parent=1 // pred_check_branch
      %175 = sbr.rel (0) target = $region41
    $region40: #{tpu_custom_call.1} parent=1 // pred_region
      %177 = dma.done [#allocation4], 16
    $region41: #{tpu_custom_call.1} parent=1 // pred_fallthru
      _
    %178 = sfence
    %179 = vsyncpa [#allocation4], 1

</llo_original>
